<compile_context>
chip_gen: v7x
topology: tpu7x:2x2x1
jax: 0.10.0
libtpu: 0.0.40
codegen_flags: <defaults>
</compile_context>

<pallas_src>
import jax
import jax.numpy as jnp
from jax.experimental import pallas as pl
from jax.experimental.pallas import tpu as pltpu

P = 128          # lane-padded feature width (F, H, C all padded to this)
_BIAS_ROWS = 24  # bias slab: b1 at row 0, b2 at row 8, bl at row 16 (8-aligned)


# ---------------------------------------------------------------------------
# Per-generation budgets
# ---------------------------------------------------------------------------
def _round_up(x, m):
    return ((x + m - 1) // m) * m


def _vmem_budget_bytes():
    """Physical VMEM minus headroom for Mosaic internal scratch.

    ~100 MiB on v5e/v6e (128 MiB physical), ~36 MiB on v7x (64 MiB physical)."""
    cap = None
    try:
        info = pltpu.get_tpu_info()
        cap = getattr(info, "vmem_capacity_bytes", None)
    except Exception:
        cap = None
    if not cap:
        cap = 64 * 1024 * 1024  # conservative (v7x-sized) default
    headroom = 28 * 1024 * 1024
    return max(int(cap) - headroom, 32 * 1024 * 1024)


def _row_tile(vmem_budget):
    """Adjacency row tile for the tiled path: large tiles on 128-MiB parts
    (amortize the ~0.35us/step overhead, feed the MXU longer row streams),
    smaller on v7x so >=2 row blocks exist for its two TensorCores."""
    return 512 if vmem_budget >= 80 * 1024 * 1024 else 256


def _const_block(shape):
    """Grid-invariant input: fetched once and single-buffered (no wasted
    double-buffer VMEM for a block whose index_map never changes)."""
    return pl.BlockSpec(shape, lambda i: (0, 0), pipeline_mode=pl.Buffered(1))


# ---------------------------------------------------------------------------
# Kernels
# ---------------------------------------------------------------------------
def gcn_fused_kernel(adj_ref, x_ref, w_ref, b_ref, out_ref):
    """Whole network in one VMEM-resident invocation (small-graph fast path).

    adj_ref: [Np, Np] bf16   x_ref: [Np, P] bf16
    w_ref:   [3P, P]  bf16 (W1 | W2 | Wl stacked)   b_ref: [24, P] f32
    out_ref: [Np, P]  f32 (lane-dense store)
    """
    adj = adj_ref[...]
    # Layer 1
    agg1 = jnp.dot(adj, x_ref[...], preferred_element_type=jnp.float32)
    h1 = jnp.maximum(
        jnp.dot(agg1.astype(jnp.bfloat16), w_ref[0:P, :],
                preferred_element_type=jnp.float32) + b_ref[0:1, :], 0.0)
    # Layer 2
    agg2 = jnp.dot(adj, h1.astype(jnp.bfloat16),
                   preferred_element_type=jnp.float32)
    h2 = jnp.maximum(
        jnp.dot(agg2.astype(jnp.bfloat16), w_ref[P:2 * P, :],
                preferred_element_type=jnp.float32) + b_ref[8:9, :], 0.0)
    # Linear head
    out = jnp.dot(h2.astype(jnp.bfloat16), w_ref[2 * P:3 * P, :],
                  preferred_element_type=jnp.float32) + b_ref[16:17, :]
    out_ref[...] = out.astype(out_ref.dtype)


def gcn_layer1_kernel(adj_ref, x_ref, w_ref, b_ref, h1_ref):
    """h1 = relu(A_hat_tile @ x @ W1 + b1) for one TM-row slab of A_hat."""
    agg = jnp.dot(adj_ref[...], x_ref[...],
                  preferred_element_type=jnp.float32)           # [TM, P] f32
    h = jnp.dot(agg.astype(jnp.bfloat16), w_ref[0:P, :],
                preferred_element_type=jnp.float32) + b_ref[0:1, :]
    h1_ref[...] = jnp.maximum(h, 0.0).astype(h1_ref.dtype)      # bf16 store


def gcn_layer2_linear_kernel(adj_ref, h1_ref, w_ref, b_ref, out_ref):
    """out = relu(A_hat_tile @ h1 @ W2 + b2) @ Wl + bl for one TM-row slab."""
    agg = jnp.dot(adj_ref[...], h1_ref[...],
                  preferred_element_type=jnp.float32)           # [TM, P] f32
    h2 = jnp.maximum(
        jnp.dot(agg.astype(jnp.bfloat16), w_ref[P:2 * P, :],
                preferred_element_type=jnp.float32) + b_ref[8:9, :], 0.0)
    out = jnp.dot(h2.astype(jnp.bfloat16), w_ref[2 * P:3 * P, :],
                  preferred_element_type=jnp.float32) + b_ref[16:17, :]
    out_ref[...] = out.astype(out_ref.dtype)                    # lane-dense store


# ---------------------------------------------------------------------------
# Graph glue (plain JAX, outside the kernels)
# ---------------------------------------------------------------------------
def build_norm_adj_padded(edge_index, num_nodes, n_pad, dtype=jnp.bfloat16):
    """Dense D^{-1/2}(A+I)D^{-1/2} with PyG gcn_norm / add_remaining_self_loops
    semantics (duplicate edges scatter-ADD, existing self loops replaced by
    weight-1 self loops), built in ONE pass directly into the padded
    [n_pad, n_pad] buffer and cast once.  Padded rows/columns stay exactly 0."""
    src = edge_index[0]
    dst = edge_index[1]
    w = jnp.where(src != dst, 1.0, 0.0).astype(jnp.float32)   # drop self loops
    a = jnp.zeros((n_pad, n_pad), jnp.float32)
    a = a.at[dst, src].add(w)                                  # duplicates accumulate
    diag = jnp.arange(n_pad)
    a = a.at[diag, diag].add((diag < num_nodes).astype(jnp.float32))  # fresh self loops
    deg = a.sum(axis=1)
    d_inv_sqrt = jnp.where(deg > 0.0, jax.lax.rsqrt(deg), 0.0)
    a = (d_inv_sqrt[:, None] * a) * d_inv_sqrt[None, :]
    return a.astype(dtype)


# ---------------------------------------------------------------------------
# Forward
# ---------------------------------------------------------------------------
def _forward_fused(adj_p, x_p, w_slab, b_slab, n_pad, vmem_budget):
    cparams = pltpu.CompilerParams(
        dimension_semantics=("arbitrary",),
        vmem_limit_bytes=vmem_budget,
    )
    return pl.pallas_call(
        gcn_fused_kernel,
        out_shape=jax.ShapeDtypeStruct((n_pad, P), jnp.float32),
        grid_spec=pltpu.PrefetchScalarGridSpec(
            num_scalar_prefetch=0,
            grid=(1,),
            in_specs=[
                pl.BlockSpec((n_pad, n_pad), lambda i: (0, 0)),
                pl.BlockSpec((n_pad, P), lambda i: (0, 0)),
                pl.BlockSpec((3 * P, P), lambda i: (0, 0)),
                pl.BlockSpec((_BIAS_ROWS, P), lambda i: (0, 0)),
            ],
            out_specs=pl.BlockSpec((n_pad, P), lambda i: (0, 0)),
        ),
        compiler_params=cparams,
    )(adj_p, x_p, w_slab, b_slab)


def _forward_tiled(adj_p, x_p, w_slab, b_slab, n_pad, tm, vmem_budget):
    grid = (n_pad // tm,)
    cparams = pltpu.CompilerParams(
        dimension_semantics=("parallel",),
        vmem_limit_bytes=vmem_budget,
    )
    # Layer 1: h1 = relu(A_hat @ x @ W1 + b1), row-tiled over A_hat rows.
    h1 = pl.pallas_call(
        gcn_layer1_kernel,
        out_shape=jax.ShapeDtypeStruct((n_pad, P), jnp.bfloat16),
        grid_spec=pltpu.PrefetchScalarGridSpec(
            num_scalar_prefetch=0,
            grid=grid,
            in_specs=[
                pl.BlockSpec((tm, n_pad), lambda i: (i, 0)),   # streaming adj rows
                _const_block((n_pad, P)),                      # full x (fetched once)
                _const_block((3 * P, P)),                      # bf16 weight slab
                _const_block((_BIAS_ROWS, P)),                 # f32 bias slab
            ],
            out_specs=pl.BlockSpec((tm, P), lambda i: (i, 0)),
        ),
        compiler_params=cparams,
    )(adj_p, x_p, w_slab, b_slab)

    # Layer 2 + Linear: out = relu(A_hat @ h1 @ W2 + b2) @ Wl + bl.
    out = pl.pallas_call(
        gcn_layer2_linear_kernel,
        out_shape=jax.ShapeDtypeStruct((n_pad, P), jnp.float32),
        grid_spec=pltpu.PrefetchScalarGridSpec(
            num_scalar_prefetch=0,
            grid=grid,
            in_specs=[
                pl.BlockSpec((tm, n_pad), lambda i: (i, 0)),   # streaming adj rows
                _const_block((n_pad, P)),                      # full h1
                _const_block((3 * P, P)),
                _const_block((_BIAS_ROWS, P)),
            ],
            out_specs=pl.BlockSpec((tm, P), lambda i: (i, 0)),
        ),
        compiler_params=cparams,
    )(adj_p, h1, w_slab, b_slab)
    return out


def gcn_net_forward(x, edge_index, params):
    w1, b1, w2, b2, wl, bl = params
    n, f = x.shape
    hid = w1.shape[1]
    c = wl.shape[1]
    assert max(f, hid, c) <= P, "feature dims must fit one 128-lane tile"

    vmem_budget = _vmem_budget_bytes()
    tm = _row_tile(vmem_budget)

    # Small-graph fast path: adjacency + features + intermediates fit VMEM
    # comfortably -> one fused pallas_call, no h1 round trip through HBM.
    n_pad_fused = _round_up(n, 128)
    fused_bytes = 2 * n_pad_fused * n_pad_fused + 10 * n_pad_fused * P * 4
    use_fused = fused_bytes <= vmem_budget // 2

    n_pad = n_pad_fused if use_fused else _round_up(n, tm)

    # One-pass padded builds (no triple materialization of O(N^2) arrays).
    adj_p = build_norm_adj_padded(edge_index, n, n_pad)              # [Np,Np] bf16
    x_p = (jnp.zeros((n_pad, P), jnp.bfloat16)
           .at[:n, :f].set(x.astype(jnp.bfloat16)))                  # [Np, P] bf16

    # Packed bf16 weight slab (W1 | W2 | Wl) -> one small DMA, no in-kernel casts.
    w_slab = jnp.zeros((3 * P, P), jnp.bfloat16)
    w_slab = w_slab.at[:f, :hid].set(w1.astype(jnp.bfloat16))
    w_slab = w_slab.at[P:P + hid, :hid].set(w2.astype(jnp.bfloat16))
    w_slab = w_slab.at[2 * P:2 * P + hid, :c].set(wl.astype(jnp.bfloat16))
    # Biases stay f32 (bias add + ReLU in f32).
    b_slab = jnp.zeros((_BIAS_ROWS, P), jnp.float32)
    b_slab = b_slab.at[0, :hid].set(b1.reshape(-1))
    b_slab = b_slab.at[8, :hid].set(b2.reshape(-1))
    b_slab = b_slab.at[16, :c].set(bl.reshape(-1))

    if use_fused:
        out = _forward_fused(adj_p, x_p, w_slab, b_slab, n_pad, vmem_budget)
    else:
        out = _forward_tiled(adj_p, x_p, w_slab, b_slab, n_pad, tm, vmem_budget)
    return out[:n, :c]


# ---------------------------------------------------------------------------
# Reference / params / demo
# ---------------------------------------------------------------------------
def gcn_net_reference(x, edge_index, params):
    """Pure-JAX f32 reference for validation."""
    w1, b1, w2, b2, wl, bl = params
    n = x.shape[0]
    adj = build_norm_adj_padded(edge_index, n, n, dtype=jnp.float32)
    h = jnp.maximum(adj @ (x @ w1) + b1, 0.0)
    h = jnp.maximum(adj @ (h @ w2) + b2, 0.0)
    return h @ wl + bl


def init_params(key, num_node_features, hidden_size, num_classes):
    k1, k2, k3, k4, k5, k6 = jax.random.split(key, 6)
    scale = 0.1
    w1 = scale * jax.random.normal(k1, (num_node_features, hidden_size), jnp.float32)
    b1 = scale * jax.random.normal(k2, (1, hidden_size), jnp.float32)
    w2 = scale * jax.random.normal(k3, (hidden_size, hidden_size), jnp.float32)
    b2 = scale * jax.random.normal(k4, (1, hidden_size), jnp.float32)
    wl = scale * jax.random.normal(k5, (hidden_size, num_classes), jnp.float32)
    bl = scale * jax.random.normal(k6, (1, num_classes), jnp.float32)
    return (w1, b1, w2, b2, wl, bl)


if __name__ == "__main__":
    # Small synthetic graph consistent with the module:
    #   hidden_size = 5, num_classes = 7 (fixed by Net.__init__),
    #   N = 16 nodes, F = 4 node features, E = 32 edges.
    N, F_IN, E = 16, 4, 32
    HIDDEN, NUM_CLASSES = 5, 7

    key = jax.random.PRNGKey(0)
    kx, ke, kp = jax.random.split(key, 3)

    x = jax.random.normal(kx, (N, F_IN), jnp.float32)
    edge_index = jax.random.randint(ke, (2, E), 0, N, jnp.int32)
    params = init_params(kp, F_IN, HIDDEN, NUM_CLASSES)

    out = jax.block_until_ready(gcn_net_forward(x, edge_index, params))
    assert out.shape == (N, NUM_CLASSES)

    ref = jax.block_until_ready(gcn_net_reference(x, edge_index, params))
    assert jnp.allclose(out, ref, atol=5e-2, rtol=5e-2), "mismatch vs f32 reference"

    print("KERNEL_OK")
</pallas_src>

<mosaic_0001>
module attributes {stable_mosaic.version = 11 : i64} {
  func.func @gcn_fused_kernel(%arg0: i32, %arg1: memref<128x128xbf16, #tpu.memory_space<vmem>>, %arg2: memref<128x128xbf16, #tpu.memory_space<vmem>>, %arg3: memref<384x128xbf16, #tpu.memory_space<vmem>>, %arg4: memref<24x128xf32, #tpu.memory_space<vmem>>, %arg5: memref<128x128xf32, #tpu.memory_space<vmem>>) attributes {dimension_semantics = [#tpu.dimension_semantics<arbitrary>], iteration_bounds = array<i64: 1>, scalar_prefetch = 0 : i64, scratch_operands = 0 : i64, tpu.core_type = #tpu.core_type<tc>, window_params = [{pipeline_mode = #tpu.pipeline_mode<synchronous>, transform_indices = @transform_0, window_bounds = array<i64: 128, 128>}, {pipeline_mode = #tpu.pipeline_mode<synchronous>, transform_indices = @transform_1, window_bounds = array<i64: 128, 128>}, {pipeline_mode = #tpu.pipeline_mode<synchronous>, transform_indices = @transform_2, window_bounds = array<i64: 384, 128>}, {pipeline_mode = #tpu.pipeline_mode<synchronous>, transform_indices = @transform_3, window_bounds = array<i64: 24, 128>}, {pipeline_mode = #tpu.pipeline_mode<synchronous>, transform_indices = @transform_4, window_bounds = array<i64: 128, 128>}]} {
    %c0 = arith.constant 0 : index
    %c0_0 = arith.constant 0 : index
    %0 = vector.load %arg1[%c0, %c0_0] : memref<128x128xbf16, #tpu.memory_space<vmem>>, vector<128x128xbf16>
    %c0_1 = arith.constant 0 : index
    %c0_2 = arith.constant 0 : index
    %1 = vector.load %arg2[%c0_1, %c0_2] : memref<128x128xbf16, #tpu.memory_space<vmem>>, vector<128x128xbf16>
    %cst = arith.constant dense<0.000000e+00> : vector<128x128xf32>
    %2 = tpu.matmul %0, %1, %cst {dimension_numbers = #tpu.dot_dimension_numbers<[1], [0], [0], [1], [0, 0, 1, 1], [], []>} : vector<128x128xbf16>, vector<128x128xbf16>, vector<128x128xf32> -> vector<128x128xf32>
    %3 = arith.truncf %2 : vector<128x128xf32> to vector<128x128xbf16>
    %c0_3 = arith.constant 0 : index
    %c0_4 = arith.constant 0 : index
    %4 = vector.load %arg3[%c0_3, %c0_4] : memref<384x128xbf16, #tpu.memory_space<vmem>>, vector<128x128xbf16>
    %cst_5 = arith.constant dense<0.000000e+00> : vector<128x128xf32>
    %5 = tpu.matmul %3, %4, %cst_5 {dimension_numbers = #tpu.dot_dimension_numbers<[1], [0], [0], [1], [0, 0, 1, 1], [], []>} : vector<128x128xbf16>, vector<128x128xbf16>, vector<128x128xf32> -> vector<128x128xf32>
    %c0_6 = arith.constant 0 : index
    %c0_7 = arith.constant 0 : index
    %6 = vector.load %arg4[%c0_6, %c0_7] : memref<24x128xf32, #tpu.memory_space<vmem>>, vector<1x128xf32>
    %7 = vector.broadcast %6 : vector<1x128xf32> to vector<128x128xf32>
    %8 = arith.addf %5, %7 : vector<128x128xf32>
    %cst_8 = arith.constant 0.000000e+00 : f32
    %9 = vector.broadcast %cst_8 : f32 to vector<128x128xf32>
    %10 = arith.maximumf %8, %9 : vector<128x128xf32>
    %11 = arith.truncf %10 : vector<128x128xf32> to vector<128x128xbf16>
    %cst_9 = arith.constant dense<0.000000e+00> : vector<128x128xf32>
    %12 = tpu.matmul %0, %11, %cst_9 {dimension_numbers = #tpu.dot_dimension_numbers<[1], [0], [0], [1], [0, 0, 1, 1], [], []>} : vector<128x128xbf16>, vector<128x128xbf16>, vector<128x128xf32> -> vector<128x128xf32>
    %13 = arith.truncf %12 : vector<128x128xf32> to vector<128x128xbf16>
    %c128 = arith.constant 128 : index
    %c0_10 = arith.constant 0 : index
    %14 = vector.load %arg3[%c128, %c0_10] : memref<384x128xbf16, #tpu.memory_space<vmem>>, vector<128x128xbf16>
    %cst_11 = arith.constant dense<0.000000e+00> : vector<128x128xf32>
    %15 = tpu.matmul %13, %14, %cst_11 {dimension_numbers = #tpu.dot_dimension_numbers<[1], [0], [0], [1], [0, 0, 1, 1], [], []>} : vector<128x128xbf16>, vector<128x128xbf16>, vector<128x128xf32> -> vector<128x128xf32>
    %c8 = arith.constant 8 : index
    %c0_12 = arith.constant 0 : index
    %16 = vector.load %arg4[%c8, %c0_12] : memref<24x128xf32, #tpu.memory_space<vmem>>, vector<1x128xf32>
    %17 = vector.broadcast %16 : vector<1x128xf32> to vector<128x128xf32>
    %18 = arith.addf %15, %17 : vector<128x128xf32>
    %cst_13 = arith.constant 0.000000e+00 : f32
    %19 = vector.broadcast %cst_13 : f32 to vector<128x128xf32>
    %20 = arith.maximumf %18, %19 : vector<128x128xf32>
    %21 = arith.truncf %20 : vector<128x128xf32> to vector<128x128xbf16>
    %c256 = arith.constant 256 : index
    %c0_14 = arith.constant 0 : index
    %22 = vector.load %arg3[%c256, %c0_14] : memref<384x128xbf16, #tpu.memory_space<vmem>>, vector<128x128xbf16>
    %cst_15 = arith.constant dense<0.000000e+00> : vector<128x128xf32>
    %23 = tpu.matmul %21, %22, %cst_15 {dimension_numbers = #tpu.dot_dimension_numbers<[1], [0], [0], [1], [0, 0, 1, 1], [], []>} : vector<128x128xbf16>, vector<128x128xbf16>, vector<128x128xf32> -> vector<128x128xf32>
    %c16 = arith.constant 16 : index
    %c0_16 = arith.constant 0 : index
    %24 = vector.load %arg4[%c16, %c0_16] : memref<24x128xf32, #tpu.memory_space<vmem>>, vector<1x128xf32>
    %25 = vector.broadcast %24 : vector<1x128xf32> to vector<128x128xf32>
    %26 = arith.addf %23, %25 : vector<128x128xf32>
    %c0_17 = arith.constant 0 : index
    %c0_18 = arith.constant 0 : index
    %27 = vector.load %arg5[%c0_17, %c0_18] : memref<128x128xf32, #tpu.memory_space<vmem>>, vector<128x128xf32>
    tpu.vector_store %arg5[%c0_17, %c0_18], %26 {strides = array<i32>} : memref<128x128xf32, #tpu.memory_space<vmem>>, vector<128x128xf32>,
    return
  }
  func.func @transform_0(%arg0: i32) -> (i32, i32) {
    %c0_i32 = arith.constant 0 : i32
    %c0_i32_0 = arith.constant 0 : i32
    %c0_i32_1 = arith.constant 0 : i32
    return %c0_i32, %c0_i32_0 : i32, i32
  }
  func.func @transform_1(%arg0: i32) -> (i32, i32) {
    %c0_i32 = arith.constant 0 : i32
    %c0_i32_0 = arith.constant 0 : i32
    %c0_i32_1 = arith.constant 0 : i32
    return %c0_i32, %c0_i32_0 : i32, i32
  }
  func.func @transform_2(%arg0: i32) -> (i32, i32) {
    %c0_i32 = arith.constant 0 : i32
    %c0_i32_0 = arith.constant 0 : i32
    %c0_i32_1 = arith.constant 0 : i32
    return %c0_i32, %c0_i32_0 : i32, i32
  }
  func.func @transform_3(%arg0: i32) -> (i32, i32) {
    %c0_i32 = arith.constant 0 : i32
    %c0_i32_0 = arith.constant 0 : i32
    %c0_i32_1 = arith.constant 0 : i32
    return %c0_i32, %c0_i32_0 : i32, i32
  }
  func.func @transform_4(%arg0: i32) -> (i32, i32) {
    %c0_i32 = arith.constant 0 : i32
    %c0_i32_0 = arith.constant 0 : i32
    %c0_i32_1 = arith.constant 0 : i32
    return %c0_i32, %c0_i32_0 : i32, i32
  }
}

</mosaic_0001>

<llo_original>
// kernel: tpu_custom_call.1
$region0: #{tpu_custom_call.1}
  #allocation0 [shape = 'u32[]', space=smem, size = 0x4, offset = 0x4, fixed_abs, tag = 'smem constant byte address 0x4 - core index']
  #allocation1 [shape = 'u32[144,128]{1,0:T(1,128)}', space=vmem, size = 0x12000, scoped, tag = 'internal scratch']
  %s0 = inlined_call_operand.hbm [shape: bf16[128,128], index: 0, kind: input, shape index: {}]
  %s1 = inlined_call_operand.hbm [shape: bf16[128,128], index: 1, kind: input, shape index: {}]
  %s2 = inlined_call_operand.hbm [shape: bf16[384,128], index: 2, kind: input, shape index: {}]
  %s3 = inlined_call_operand.hbm [shape: f32[24,128], index: 3, kind: input, shape index: {}]
  %s4 = inlined_call_operand.hbm [shape: f32[128,128], index: 4, kind: output, shape index: {}]
  %s5 = sld [smem:[#allocation0]]
  $region42: #{tpu_custom_call.1} parent=0
    _
  %s7 = ssub.s32 1, %s5
  %s8 = scalar_select 0, %s7, %s5
  $region1: #{tpu_custom_call.1} parent=0
    #allocation2 [shape = 'u8[32768]{0}', space=vmem, size = 0x8000, scoped, tag = 'input window, operand 0, single buffered']
    #allocation3 [shape = 's32[1]{0}', space=sflag, size = 0x4, scoped, tag = 'scoped memory for tpu_custom_call.1']
    #allocation4 [shape = 's32[1]{0}', space=sflag, size = 0x4, scoped, tag = 'scoped memory for tpu_custom_call.1']
    #allocation5 [shape = 'u8[32768]{0}', space=vmem, size = 0x8000, scoped, tag = 'input window, operand 1, single buffered']
    #allocation6 [shape = 's32[1]{0}', space=sflag, size = 0x4, scoped, tag = 'scoped memory for tpu_custom_call.1']
    #allocation7 [shape = 'u8[98304]{0}', space=vmem, size = 0x18000, scoped, tag = 'input window, operand 2, single buffered']
    #allocation8 [shape = 'u8[12288]{0}', space=vmem, size = 0x3000, scoped, tag = 'input window, operand 3, single buffered']
    #allocation9 [shape = 's32[1]{0}', space=sflag, size = 0x4, scoped, tag = 'scoped memory for tpu_custom_call.1']
    #allocation10 [shape = 'u8[65536]{0}', space=vmem, size = 0x10000, scoped, tag = 'output window, operand 0, single buffered']
    %9 = vsyncpa [#allocation3], 0
    %10 = vsyncpa [#allocation6], 0
    %11 = vsyncpa [#allocation9], 0
    %12 = vsyncpa [#allocation4], 0
    // Predicated region
    $region2: #{tpu_custom_call.1} parent=1 // pred_check
      _
    $region3: #{tpu_custom_call.1} parent=1 // pred_check_branch
      %14 = sbr.rel (0) target = $region5
    $region4: #{tpu_custom_call.1} parent=1 // pred_region
      %s16 = ssub.s32 1024, 1024
      %17 = vsyncadd [#allocation3], %s16
      %s18 = sshll.u32 [#allocation2], 4
      %s19 = int_to_ptr.vmem [resolvable:$true] %s18
      %24 = dma.hbm_to_vmem [thread:$0]  %s0, 1024, %s19, [#allocation3], 64, 64, 4
    $region5: #{tpu_custom_call.1} parent=1 // pred_fallthru
      _
    // Predicated region
    $region6: #{tpu_custom_call.1} parent=1 // pred_check
      _
    $region7: #{tpu_custom_call.1} parent=1 // pred_check_branch
      %26 = sbr.rel (0) target = $region9
    $region8: #{tpu_custom_call.1} parent=1 // pred_region
      %s28 = ssub.s32 1024, 1024
      %29 = vsyncadd [#allocation6], %s28
      %s30 = sshll.u32 [#allocation5], 4
      %s31 = int_to_ptr.vmem [resolvable:$true] %s30
      %36 = dma.hbm_to_vmem [thread:$0]  %s1, 1024, %s31, [#allocation6], 64, 64, 4
    $region9: #{tpu_custom_call.1} parent=1 // pred_fallthru
      _
    // Predicated region
    $region10: #{tpu_custom_call.1} parent=1 // pred_check
      _
    $region11: #{tpu_custom_call.1} parent=1 // pred_check_branch
      %38 = sbr.rel (0) target = $region13
    $region12: #{tpu_custom_call.1} parent=1 // pred_region
      %s40 = ssub.s32 3072, 3072
      %41 = vsyncadd [#allocation6], %s40
      %s42 = sshll.u32 [#allocation7], 4
      %s43 = int_to_ptr.vmem [resolvable:$true] %s42
      %48 = dma.hbm_to_vmem [thread:$0]  %s2, 3072, %s43, [#allocation6], 64, 64, 4
    $region13: #{tpu_custom_call.1} parent=1 // pred_fallthru
      _
    // Predicated region
    $region14: #{tpu_custom_call.1} parent=1 // pred_check
      _
    $region15: #{tpu_custom_call.1} parent=1 // pred_check_branch
      %50 = sbr.rel (0) target = $region17
    $region16: #{tpu_custom_call.1} parent=1 // pred_region
      %s52 = ssub.s32 384, 384
      %53 = vsyncadd [#allocation9], %s52
      %s54 = sshll.u32 [#allocation8], 4
      %s55 = int_to_ptr.vmem [resolvable:$true] %s54
      %60 = dma.hbm_to_vmem [thread:$0]  %s3, 384, %s55, [#allocation9], 128, 128, 8
    $region17: #{tpu_custom_call.1} parent=1 // pred_fallthru
      _
    // Predicated region
    $region18: #{tpu_custom_call.1} parent=1 // pred_check
      _
    $region19: #{tpu_custom_call.1} parent=1 // pred_check_branch
      %62 = sbr.rel (0) target = $region21
    $region20: #{tpu_custom_call.1} parent=1 // pred_region
      %63 = dma.done [#allocation3], 1024
    $region21: #{tpu_custom_call.1} parent=1 // pred_fallthru
      _
    // Predicated region
    $region22: #{tpu_custom_call.1} parent=1 // pred_check
      _
    $region23: #{tpu_custom_call.1} parent=1 // pred_check_branch
      %65 = sbr.rel (0) target = $region25
    $region24: #{tpu_custom_call.1} parent=1 // pred_region
      %66 = dma.done [#allocation6], 1024
    $region25: #{tpu_custom_call.1} parent=1 // pred_fallthru
      _
    // Predicated region
    $region26: #{tpu_custom_call.1} parent=1 // pred_check
      _
    $region27: #{tpu_custom_call.1} parent=1 // pred_check_branch
      %68 = sbr.rel (0) target = $region29
    $region28: #{tpu_custom_call.1} parent=1 // pred_region
      %69 = dma.done [#allocation6], 3072
    $region29: #{tpu_custom_call.1} parent=1 // pred_fallthru
      _
    // Predicated region
    $region30: #{tpu_custom_call.1} parent=1 // pred_check
      _
    $region31: #{tpu_custom_call.1} parent=1 // pred_check_branch
      %71 = sbr.rel (0) target = $region33
    $region32: #{tpu_custom_call.1} parent=1 // pred_region
      %72 = dma.done [#allocation9], 384
    $region33: #{tpu_custom_call.1} parent=1 // pred_fallthru
      _
    %v74 = vld [vmem:[#allocation2] sm:$0xf]
    %v75 = vld [vmem:[#allocation2 + $0x4] sm:$0xf]
    %v76 = vld [vmem:[#allocation2 + $0x8] sm:$0xf]
    %v77 = vld [vmem:[#allocation2 + $0xc] sm:$0xf]
    %v78 = vld [vmem:[#allocation2 + $0x10] sm:$0xf]
    %v79 = vld [vmem:[#allocation2 + $0x14] sm:$0xf]
    %v80 = vld [vmem:[#allocation2 + $0x18] sm:$0xf]
    %v81 = vld [vmem:[#allocation2 + $0x1c] sm:$0xf]
    %v82 = vld [vmem:[#allocation2 + $0x20] sm:$0xf]
    %v83 = vld [vmem:[#allocation2 + $0x24] sm:$0xf]
    %v84 = vld [vmem:[#allocation2 + $0x28] sm:$0xf]
    %v85 = vld [vmem:[#allocation2 + $0x2c] sm:$0xf]
    %v86 = vld [vmem:[#allocation2 + $0x30] sm:$0xf]
    %v87 = vld [vmem:[#allocation2 + $0x34] sm:$0xf]
    %v88 = vld [vmem:[#allocation2 + $0x38] sm:$0xf]
    %v89 = vld [vmem:[#allocation2 + $0x3c] sm:$0xf]
    %v90 = vld [vmem:[#allocation5] sm:$0xf]
    %v91 = vld [vmem:[#allocation5 + $0x4] sm:$0xf]
    %v92 = vld [vmem:[#allocation5 + $0x8] sm:$0xf]
    %v93 = vld [vmem:[#allocation5 + $0xc] sm:$0xf]
    %v94 = vld [vmem:[#allocation5 + $0x10] sm:$0xf]
    %v95 = vld [vmem:[#allocation5 + $0x14] sm:$0xf]
    %v96 = vld [vmem:[#allocation5 + $0x18] sm:$0xf]
    %v97 = vld [vmem:[#allocation5 + $0x1c] sm:$0xf]
    %v98 = vld [vmem:[#allocation5 + $0x20] sm:$0xf]
    %v99 = vld [vmem:[#allocation5 + $0x24] sm:$0xf]
    %v100 = vld [vmem:[#allocation5 + $0x28] sm:$0xf]
    %v101 = vld [vmem:[#allocation5 + $0x2c] sm:$0xf]
    %v102 = vld [vmem:[#allocation5 + $0x30] sm:$0xf]
    %v103 = vld [vmem:[#allocation5 + $0x34] sm:$0xf]
    %v104 = vld [vmem:[#allocation5 + $0x38] sm:$0xf]
    %v105 = vld [vmem:[#allocation5 + $0x3c] sm:$0xf]
    %v122 = vunpack.c.l.b16 %v74
    %v123 = vunpack.c.l.b16 %v75
    %v124 = vunpack.c.l.b16 %v76
    %v125 = vunpack.c.l.b16 %v77
    %v126 = vunpack.c.l.b16 %v78
    %v127 = vunpack.c.l.b16 %v79
    %v128 = vunpack.c.l.b16 %v80
    %v129 = vunpack.c.l.b16 %v81
    %v130 = vunpack.c.l.b16 %v82
    %v131 = vunpack.c.l.b16 %v83
    %v132 = vunpack.c.l.b16 %v84
    %v133 = vunpack.c.l.b16 %v85
    %v134 = vunpack.c.l.b16 %v86
    %v135 = vunpack.c.l.b16 %v87
    %v136 = vunpack.c.l.b16 %v88
    %v137 = vunpack.c.l.b16 %v89
    %v138 = vpack.c.b16 %v123, %v122
    %v139 = vpack.c.b16 %v125, %v124
    %v140 = vpack.c.b16 %v127, %v126
    %v141 = vpack.c.b16 %v129, %v128
    %v142 = vpack.c.b16 %v131, %v130
    %v143 = vpack.c.b16 %v133, %v132
    %v144 = vpack.c.b16 %v135, %v134
    %v145 = vpack.c.b16 %v137, %v136
    %v170 = vunpack.c.l.b16 %v90
    %v171 = vunpack.c.l.b16 %v91
    %v172 = vunpack.c.l.b16 %v92
    %v173 = vunpack.c.l.b16 %v93
    %v174 = vunpack.c.l.b16 %v94
    %v175 = vunpack.c.l.b16 %v95
    %v176 = vunpack.c.l.b16 %v96
    %v177 = vunpack.c.l.b16 %v97
    %v178 = vunpack.c.l.b16 %v98
    %v179 = vunpack.c.l.b16 %v99
    %v180 = vunpack.c.l.b16 %v100
    %v181 = vunpack.c.l.b16 %v101
    %v182 = vunpack.c.l.b16 %v102
    %v183 = vunpack.c.l.b16 %v103
    %v184 = vunpack.c.l.b16 %v104
    %v185 = vunpack.c.l.b16 %v105
    %v186 = vpack.c.b16 %v171, %v170
    %v187 = vpack.c.b16 %v173, %v172
    %v188 = vpack.c.b16 %v175, %v174
    %v189 = vpack.c.b16 %v177, %v176
    %v190 = vpack.c.b16 %v179, %v178
    %v191 = vpack.c.b16 %v181, %v180
    %v192 = vpack.c.b16 %v183, %v182
    %v193 = vpack.c.b16 %v185, %v184
    %202 = vmatprep.subr.bf16.mxu0 0
    %203 = vmatpush1.bf16.msra.mxu0 %v186
    %204 = vmatprep.subr.bf16.mxu0 0
    %205 = vmatpush1.bf16.msra.mxu0 %v187
    %206 = vmatprep.subr.bf16.mxu0 0
    %207 = vmatpush1.bf16.msra.mxu0 %v188
    %208 = vmatprep.subr.bf16.mxu0 0
    %209 = vmatpush1.bf16.msra.mxu0 %v189
    %210 = vmatprep.subr.bf16.mxu0 0
    %211 = vmatpush1.bf16.msra.mxu0 %v190
    %212 = vmatprep.subr.bf16.mxu0 0
    %213 = vmatpush1.bf16.msra.mxu0 %v191
    %214 = vmatprep.subr.bf16.mxu0 0
    %215 = vmatpush1.bf16.msra.mxu0 %v192
    %216 = vmatprep.subr.bf16.mxu0 0
    %217 = vmatpush1.bf16.msra.mxu0 %v193
    %218 = vmatprep.subr.bf16.mxu0 0
    %219 = vmatpush1.bf16.msra.mxu0 0
    %220 = vmatprep.subr.bf16.mxu0 0
    %221 = vmatpush1.bf16.msra.mxu0 0
    %222 = vmatprep.subr.bf16.mxu0 0
    %223 = vmatpush1.bf16.msra.mxu0 0
    %224 = vmatprep.subr.bf16.mxu0 0
    %225 = vmatpush1.bf16.msra.mxu0 0
    %226 = vmatprep.subr.bf16.mxu0 0
    %227 = vmatpush1.bf16.msra.mxu0 0
    %228 = vmatprep.subr.bf16.mxu0 0
    %229 = vmatpush1.bf16.msra.mxu0 0
    %230 = vmatprep.subr.bf16.mxu0 0
    %231 = vmatpush1.bf16.msra.mxu0 0
    %232 = vmatprep.subr.bf16.mxu0 0
    %233 = vmatpush1.bf16.msra.mxu0 0
    %234 = vmatprep.mubr.bf16.mxu0 0
    %235 = vmatmul.mubr.bf16.gmra.mrb[0].mxu0 %v138
    %v236 = vpop.f32.mrb[0].mxu0
    %v237 = vadd.f32 0.0, %v236
    %v238 = vpop.f32.mrb[0].mxu0
    %v239 = vpop.f32.mrb[0].mxu0
    %v240 = vadd.f32 0.0, %v239
    %v241 = vpop.f32.mrb[0].mxu0
    %242 = vmatprep.mubr.bf16.mxu0 0
    %243 = vmatmul.mubr.bf16.gmra.mrb[0].mxu0 %v139
    %v244 = vpop.f32.mrb[0].mxu0
    %v245 = vadd.f32 0.0, %v244
    %v246 = vpop.f32.mrb[0].mxu0
    %v247 = vpop.f32.mrb[0].mxu0
    %v248 = vadd.f32 0.0, %v247
    %v249 = vpop.f32.mrb[0].mxu0
    %250 = vmatprep.mubr.bf16.mxu0 0
    %251 = vmatmul.mubr.bf16.gmra.mrb[0].mxu0 %v140
    %v252 = vpop.f32.mrb[0].mxu0
    %v253 = vadd.f32 0.0, %v252
    %v254 = vpop.f32.mrb[0].mxu0
    %v255 = vpop.f32.mrb[0].mxu0
    %v256 = vadd.f32 0.0, %v255
    %v257 = vpop.f32.mrb[0].mxu0
    %258 = vmatprep.mubr.bf16.mxu0 0
    %259 = vmatmul.mubr.bf16.gmra.mrb[0].mxu0 %v141
    %v260 = vpop.f32.mrb[0].mxu0
    %v261 = vadd.f32 0.0, %v260
    %v262 = vpop.f32.mrb[0].mxu0
    %v263 = vpop.f32.mrb[0].mxu0
    %v264 = vadd.f32 0.0, %v263
    %v265 = vpop.f32.mrb[0].mxu0
    %266 = vmatprep.mubr.bf16.mxu0 0
    %267 = vmatmul.mubr.bf16.gmra.mrb[0].mxu0 %v142
    %v268 = vpop.f32.mrb[0].mxu0
    %v269 = vadd.f32 0.0, %v268
    %v270 = vpop.f32.mrb[0].mxu0
    %v271 = vpop.f32.mrb[0].mxu0
    %v272 = vadd.f32 0.0, %v271
    %v273 = vpop.f32.mrb[0].mxu0
    %274 = vmatprep.mubr.bf16.mxu0 0
    %275 = vmatmul.mubr.bf16.gmra.mrb[0].mxu0 %v143
    %v276 = vpop.f32.mrb[0].mxu0
    %v277 = vadd.f32 0.0, %v276
    %v278 = vpop.f32.mrb[0].mxu0
    %v279 = vpop.f32.mrb[0].mxu0
    %v280 = vadd.f32 0.0, %v279
    %v281 = vpop.f32.mrb[0].mxu0
    %282 = vmatprep.mubr.bf16.mxu0 0
    %283 = vmatmul.mubr.bf16.gmra.mrb[0].mxu0 %v144
    %v284 = vpop.f32.mrb[0].mxu0
    %v285 = vadd.f32 0.0, %v284
    %v286 = vpop.f32.mrb[0].mxu0
    %v287 = vpop.f32.mrb[0].mxu0
    %v288 = vadd.f32 0.0, %v287
    %v289 = vpop.f32.mrb[0].mxu0
    %290 = vmatprep.mubr.bf16.mxu0 0
    %291 = vmatmul.mubr.bf16.gmra.mrb[0].mxu0 %v145
    %v292 = vpop.f32.mrb[0].mxu0
    %v293 = vadd.f32 0.0, %v292
    %v294 = vpop.f32.mrb[0].mxu0
    %v295 = vpop.f32.mrb[0].mxu0
    %v296 = vadd.f32 0.0, %v295
    %v297 = vpop.f32.mrb[0].mxu0
    %298 = vdwg.mxu0
    %v299 = vpack.c.bf16 %v240, %v237
    %v300 = vpack.c.bf16 %v248, %v245
    %v301 = vpack.c.bf16 %v256, %v253
    %v302 = vpack.c.bf16 %v264, %v261
    %v303 = vpack.c.bf16 %v272, %v269
    %v304 = vpack.c.bf16 %v280, %v277
    %v305 = vpack.c.bf16 %v288, %v285
    %v306 = vpack.c.bf16 %v296, %v293
    %v307 = vld [vmem:[#allocation7] sm:$0xf]
    %v308 = vld [vmem:[#allocation7 + $0x4] sm:$0xf]
    %v309 = vld [vmem:[#allocation7 + $0x8] sm:$0xf]
    %v310 = vld [vmem:[#allocation7 + $0xc] sm:$0xf]
    %v311 = vld [vmem:[#allocation7 + $0x10] sm:$0xf]
    %v312 = vld [vmem:[#allocation7 + $0x14] sm:$0xf]
    %v313 = vld [vmem:[#allocation7 + $0x18] sm:$0xf]
    %v314 = vld [vmem:[#allocation7 + $0x1c] sm:$0xf]
    %v315 = vld [vmem:[#allocation7 + $0x20] sm:$0xf]
    %v316 = vld [vmem:[#allocation7 + $0x24] sm:$0xf]
    %v317 = vld [vmem:[#allocation7 + $0x28] sm:$0xf]
    %v318 = vld [vmem:[#allocation7 + $0x2c] sm:$0xf]
    %v319 = vld [vmem:[#allocation7 + $0x30] sm:$0xf]
    %v320 = vld [vmem:[#allocation7 + $0x34] sm:$0xf]
    %v321 = vld [vmem:[#allocation7 + $0x38] sm:$0xf]
    %v322 = vld [vmem:[#allocation7 + $0x3c] sm:$0xf]
    %v323 = vld [vmem:[#allocation8] sm:$0x1]
    %v324 = vlaneseq
    %v325 = vshrl.u32 %v324, 7
    %v326 = vsub.s32 0, %v325
    %v327 = vrot.slane %v323, %v326
    %v344 = vunpack.c.l.b16 %v307
    %v345 = vunpack.c.l.b16 %v308
    %v346 = vunpack.c.l.b16 %v309
    %v347 = vunpack.c.l.b16 %v310
    %v348 = vunpack.c.l.b16 %v311
    %v349 = vunpack.c.l.b16 %v312
    %v350 = vunpack.c.l.b16 %v313
    %v351 = vunpack.c.l.b16 %v314
    %v352 = vunpack.c.l.b16 %v315
    %v353 = vunpack.c.l.b16 %v316
    %v354 = vunpack.c.l.b16 %v317
    %v355 = vunpack.c.l.b16 %v318
    %v356 = vunpack.c.l.b16 %v319
    %v357 = vunpack.c.l.b16 %v320
    %v358 = vunpack.c.l.b16 %v321
    %v359 = vunpack.c.l.b16 %v322
    %v360 = vpack.c.b16 %v345, %v344
    %v361 = vpack.c.b16 %v347, %v346
    %v362 = vpack.c.b16 %v349, %v348
    %v363 = vpack.c.b16 %v351, %v350
    %v364 = vpack.c.b16 %v353, %v352
    %v365 = vpack.c.b16 %v355, %v354
    %v366 = vpack.c.b16 %v357, %v356
    %v367 = vpack.c.b16 %v359, %v358
    %376 = vmatprep.subr.bf16.mxu0 0
    %377 = vmatpush1.bf16.msra.mxu0 %v360
    %378 = vmatprep.subr.bf16.mxu0 0
    %379 = vmatpush1.bf16.msra.mxu0 %v361
    %380 = vmatprep.subr.bf16.mxu0 0
    %381 = vmatpush1.bf16.msra.mxu0 %v362
    %382 = vmatprep.subr.bf16.mxu0 0
    %383 = vmatpush1.bf16.msra.mxu0 %v363
    %384 = vmatprep.subr.bf16.mxu0 0
    %385 = vmatpush1.bf16.msra.mxu0 %v364
    %386 = vmatprep.subr.bf16.mxu0 0
    %387 = vmatpush1.bf16.msra.mxu0 %v365
    %388 = vmatprep.subr.bf16.mxu0 0
    %389 = vmatpush1.bf16.msra.mxu0 %v366
    %390 = vmatprep.subr.bf16.mxu0 0
    %391 = vmatpush1.bf16.msra.mxu0 %v367
    %392 = vmatprep.subr.bf16.mxu0 0
    %393 = vmatpush1.bf16.msra.mxu0 0
    %394 = vmatprep.subr.bf16.mxu0 0
    %395 = vmatpush1.bf16.msra.mxu0 0
    %396 = vmatprep.subr.bf16.mxu0 0
    %397 = vmatpush1.bf16.msra.mxu0 0
    %398 = vmatprep.subr.bf16.mxu0 0
    %399 = vmatpush1.bf16.msra.mxu0 0
    %400 = vmatprep.subr.bf16.mxu0 0
    %401 = vmatpush1.bf16.msra.mxu0 0
    %402 = vmatprep.subr.bf16.mxu0 0
    %403 = vmatpush1.bf16.msra.mxu0 0
    %404 = vmatprep.subr.bf16.mxu0 0
    %405 = vmatpush1.bf16.msra.mxu0 0
    %406 = vmatprep.subr.bf16.mxu0 0
    %407 = vmatpush1.bf16.msra.mxu0 0
    %408 = vmatprep.mubr.bf16.mxu0 0
    %409 = vmatmul.mubr.bf16.gmra.mrb[0].mxu0 %v299
    %v410 = vpop.f32.mrb[0].mxu0
    %v411 = vadd.f32 %v327, %v410
    %v412 = vpop.f32.mrb[0].mxu0
    %v413 = vpop.f32.mrb[0].mxu0
    %v414 = vadd.f32 %v327, %v413
    %v415 = vpop.f32.mrb[0].mxu0
    %416 = vmatprep.mubr.bf16.mxu0 0
    %417 = vmatmul.mubr.bf16.gmra.mrb[0].mxu0 %v300
    %v418 = vpop.f32.mrb[0].mxu0
    %v419 = vadd.f32 %v327, %v418
    %v420 = vpop.f32.mrb[0].mxu0
    %v421 = vpop.f32.mrb[0].mxu0
    %v422 = vadd.f32 %v327, %v421
    %v423 = vpop.f32.mrb[0].mxu0
    %424 = vmatprep.mubr.bf16.mxu0 0
    %425 = vmatmul.mubr.bf16.gmra.mrb[0].mxu0 %v301
    %v426 = vpop.f32.mrb[0].mxu0
    %v427 = vadd.f32 %v327, %v426
    %v428 = vpop.f32.mrb[0].mxu0
    %v429 = vpop.f32.mrb[0].mxu0
    %v430 = vadd.f32 %v327, %v429
    %v431 = vpop.f32.mrb[0].mxu0
    %432 = vmatprep.mubr.bf16.mxu0 0
    %433 = vmatmul.mubr.bf16.gmra.mrb[0].mxu0 %v302
    %v434 = vpop.f32.mrb[0].mxu0
    %v435 = vadd.f32 %v327, %v434
    %v436 = vpop.f32.mrb[0].mxu0
    %v437 = vpop.f32.mrb[0].mxu0
    %v438 = vadd.f32 %v327, %v437
    %v439 = vpop.f32.mrb[0].mxu0
    %440 = vmatprep.mubr.bf16.mxu0 0
    %441 = vmatmul.mubr.bf16.gmra.mrb[0].mxu0 %v303
    %v442 = vpop.f32.mrb[0].mxu0
    %v443 = vadd.f32 %v327, %v442
    %v444 = vpop.f32.mrb[0].mxu0
    %v445 = vpop.f32.mrb[0].mxu0
    %v446 = vadd.f32 %v327, %v445
    %v447 = vpop.f32.mrb[0].mxu0
    %448 = vmatprep.mubr.bf16.mxu0 0
    %449 = vmatmul.mubr.bf16.gmra.mrb[0].mxu0 %v304
    %v450 = vpop.f32.mrb[0].mxu0
    %v451 = vadd.f32 %v327, %v450
    %v452 = vpop.f32.mrb[0].mxu0
    %v453 = vpop.f32.mrb[0].mxu0
    %v454 = vadd.f32 %v327, %v453
    %v455 = vpop.f32.mrb[0].mxu0
    %456 = vmatprep.mubr.bf16.mxu0 0
    %457 = vmatmul.mubr.bf16.gmra.mrb[0].mxu0 %v305
    %v458 = vpop.f32.mrb[0].mxu0
    %v459 = vadd.f32 %v327, %v458
    %v460 = vpop.f32.mrb[0].mxu0
    %v461 = vpop.f32.mrb[0].mxu0
    %v462 = vadd.f32 %v327, %v461
    %v463 = vpop.f32.mrb[0].mxu0
    %464 = vmatprep.mubr.bf16.mxu0 0
    %465 = vmatmul.mubr.bf16.gmra.mrb[0].mxu0 %v306
    %v466 = vpop.f32.mrb[0].mxu0
    %v467 = vadd.f32 %v327, %v466
    %v468 = vpop.f32.mrb[0].mxu0
    %v469 = vpop.f32.mrb[0].mxu0
    %v470 = vadd.f32 %v327, %v469
    %v471 = vpop.f32.mrb[0].mxu0
    %472 = vdwg.mxu0
    %v473 = vmax.f32 %v411, 0.0
    %v474 = vmax.f32 %v414, 0.0
    %v475 = vmax.f32 %v419, 0.0
    %v476 = vmax.f32 %v422, 0.0
    %v477 = vmax.f32 %v427, 0.0
    %v478 = vmax.f32 %v430, 0.0
    %v479 = vmax.f32 %v435, 0.0
    %v480 = vmax.f32 %v438, 0.0
    %v481 = vmax.f32 %v443, 0.0
    %v482 = vmax.f32 %v446, 0.0
    %v483 = vmax.f32 %v451, 0.0
    %v484 = vmax.f32 %v454, 0.0
    %v485 = vmax.f32 %v459, 0.0
    %v486 = vmax.f32 %v462, 0.0
    %v487 = vmax.f32 %v467, 0.0
    %v488 = vmax.f32 %v470, 0.0
    %v489 = vpack.c.bf16 %v474, %v473
    %v490 = vpack.c.bf16 %v476, %v475
    %v491 = vpack.c.bf16 %v478, %v477
    %v492 = vpack.c.bf16 %v480, %v479
    %v493 = vpack.c.bf16 %v482, %v481
    %v494 = vpack.c.bf16 %v484, %v483
    %v495 = vpack.c.bf16 %v486, %v485
    %v496 = vpack.c.bf16 %v488, %v487
    %497 = vmatprep.subr.bf16.mxu0 0
    %498 = vmatpush1.bf16.msra.mxu0 %v489
    %499 = vmatprep.subr.bf16.mxu0 0
    %500 = vmatpush1.bf16.msra.mxu0 %v490
    %501 = vmatprep.subr.bf16.mxu0 0
    %502 = vmatpush1.bf16.msra.mxu0 %v491
    %503 = vmatprep.subr.bf16.mxu0 0
    %504 = vmatpush1.bf16.msra.mxu0 %v492
    %505 = vmatprep.subr.bf16.mxu0 0
    %506 = vmatpush1.bf16.msra.mxu0 %v493
    %507 = vmatprep.subr.bf16.mxu0 0
    %508 = vmatpush1.bf16.msra.mxu0 %v494
    %509 = vmatprep.subr.bf16.mxu0 0
    %510 = vmatpush1.bf16.msra.mxu0 %v495
    %511 = vmatprep.subr.bf16.mxu0 0
    %512 = vmatpush1.bf16.msra.mxu0 %v496
    %513 = vmatprep.subr.bf16.mxu0 0
    %514 = vmatpush1.bf16.msra.mxu0 0
    %515 = vmatprep.subr.bf16.mxu0 0
    %516 = vmatpush1.bf16.msra.mxu0 0
    %517 = vmatprep.subr.bf16.mxu0 0
    %518 = vmatpush1.bf16.msra.mxu0 0
    %519 = vmatprep.subr.bf16.mxu0 0
    %520 = vmatpush1.bf16.msra.mxu0 0
    %521 = vmatprep.subr.bf16.mxu0 0
    %522 = vmatpush1.bf16.msra.mxu0 0
    %523 = vmatprep.subr.bf16.mxu0 0
    %524 = vmatpush1.bf16.msra.mxu0 0
    %525 = vmatprep.subr.bf16.mxu0 0
    %526 = vmatpush1.bf16.msra.mxu0 0
    %527 = vmatprep.subr.bf16.mxu0 0
    %528 = vmatpush1.bf16.msra.mxu0 0
    %529 = vmatprep.mubr.bf16.mxu0 0
    %530 = vmatmul.mubr.bf16.gmra.mrb[0].mxu0 %v138
    %v531 = vpop.f32.mrb[0].mxu0
    %v532 = vadd.f32 0.0, %v531
    %v533 = vpop.f32.mrb[0].mxu0
    %v534 = vpop.f32.mrb[0].mxu0
    %v535 = vadd.f32 0.0, %v534
    %v536 = vpop.f32.mrb[0].mxu0
    %537 = vmatprep.mubr.bf16.mxu0 0
    %538 = vmatmul.mubr.bf16.gmra.mrb[0].mxu0 %v139
    %v539 = vpop.f32.mrb[0].mxu0
    %v540 = vadd.f32 0.0, %v539
    %v541 = vpop.f32.mrb[0].mxu0
    %v542 = vpop.f32.mrb[0].mxu0
    %v543 = vadd.f32 0.0, %v542
    %v544 = vpop.f32.mrb[0].mxu0
    %545 = vmatprep.mubr.bf16.mxu0 0
    %546 = vmatmul.mubr.bf16.gmra.mrb[0].mxu0 %v140
    %v547 = vpop.f32.mrb[0].mxu0
    %v548 = vadd.f32 0.0, %v547
    %v549 = vpop.f32.mrb[0].mxu0
    %v550 = vpop.f32.mrb[0].mxu0
    %v551 = vadd.f32 0.0, %v550
    %v552 = vpop.f32.mrb[0].mxu0
    %553 = vmatprep.mubr.bf16.mxu0 0
    %554 = vmatmul.mubr.bf16.gmra.mrb[0].mxu0 %v141
    %v555 = vpop.f32.mrb[0].mxu0
    %v556 = vadd.f32 0.0, %v555
    %v557 = vpop.f32.mrb[0].mxu0
    %v558 = vpop.f32.mrb[0].mxu0
    %v559 = vadd.f32 0.0, %v558
    %v560 = vpop.f32.mrb[0].mxu0
    %561 = vmatprep.mubr.bf16.mxu0 0
    %562 = vmatmul.mubr.bf16.gmra.mrb[0].mxu0 %v142
    %v563 = vpop.f32.mrb[0].mxu0
    %v564 = vadd.f32 0.0, %v563
    %v565 = vpop.f32.mrb[0].mxu0
    %v566 = vpop.f32.mrb[0].mxu0
    %v567 = vadd.f32 0.0, %v566
    %v568 = vpop.f32.mrb[0].mxu0
    %569 = vmatprep.mubr.bf16.mxu0 0
    %570 = vmatmul.mubr.bf16.gmra.mrb[0].mxu0 %v143
    %v571 = vpop.f32.mrb[0].mxu0
    %v572 = vadd.f32 0.0, %v571
    %v573 = vpop.f32.mrb[0].mxu0
    %v574 = vpop.f32.mrb[0].mxu0
    %v575 = vadd.f32 0.0, %v574
    %v576 = vpop.f32.mrb[0].mxu0
    %577 = vmatprep.mubr.bf16.mxu0 0
    %578 = vmatmul.mubr.bf16.gmra.mrb[0].mxu0 %v144
    %v579 = vpop.f32.mrb[0].mxu0
    %v580 = vadd.f32 0.0, %v579
    %v581 = vpop.f32.mrb[0].mxu0
    %v582 = vpop.f32.mrb[0].mxu0
    %v583 = vadd.f32 0.0, %v582
    %v584 = vpop.f32.mrb[0].mxu0
    %585 = vmatprep.mubr.bf16.mxu0 0
    %586 = vmatmul.mubr.bf16.gmra.mrb[0].mxu0 %v145
    %v587 = vpop.f32.mrb[0].mxu0
    %v588 = vadd.f32 0.0, %v587
    %v589 = vpop.f32.mrb[0].mxu0
    %v590 = vpop.f32.mrb[0].mxu0
    %v591 = vadd.f32 0.0, %v590
    %v592 = vpop.f32.mrb[0].mxu0
    %593 = vdwg.mxu0
    %v594 = vpack.c.bf16 %v535, %v532
    %v595 = vpack.c.bf16 %v543, %v540
    %v596 = vpack.c.bf16 %v551, %v548
    %v597 = vpack.c.bf16 %v559, %v556
    %v598 = vpack.c.bf16 %v567, %v564
    %v599 = vpack.c.bf16 %v575, %v572
    %v600 = vpack.c.bf16 %v583, %v580
    %v601 = vpack.c.bf16 %v591, %v588
    %v602 = vld [vmem:[#allocation7 + $0x40] sm:$0xf]
    %v603 = vld [vmem:[#allocation7 + $0x44] sm:$0xf]
    %v604 = vld [vmem:[#allocation7 + $0x48] sm:$0xf]
    %v605 = vld [vmem:[#allocation7 + $0x4c] sm:$0xf]
    %v606 = vld [vmem:[#allocation7 + $0x50] sm:$0xf]
    %v607 = vld [vmem:[#allocation7 + $0x54] sm:$0xf]
    %v608 = vld [vmem:[#allocation7 + $0x58] sm:$0xf]
    %v609 = vld [vmem:[#allocation7 + $0x5c] sm:$0xf]
    %v610 = vld [vmem:[#allocation7 + $0x60] sm:$0xf]
    %v611 = vld [vmem:[#allocation7 + $0x64] sm:$0xf]
    %v612 = vld [vmem:[#allocation7 + $0x68] sm:$0xf]
    %v613 = vld [vmem:[#allocation7 + $0x6c] sm:$0xf]
    %v614 = vld [vmem:[#allocation7 + $0x70] sm:$0xf]
    %v615 = vld [vmem:[#allocation7 + $0x74] sm:$0xf]
    %v616 = vld [vmem:[#allocation7 + $0x78] sm:$0xf]
    %v617 = vld [vmem:[#allocation7 + $0x7c] sm:$0xf]
    %v618 = vld [vmem:[#allocation8 + $0x8] sm:$0x1]
    %v619 = vlaneseq
    %v620 = vshrl.u32 %v619, 7
    %v621 = vsub.s32 0, %v620
    %v622 = vrot.slane %v618, %v621
    %v639 = vunpack.c.l.b16 %v602
    %v640 = vunpack.c.l.b16 %v603
    %v641 = vunpack.c.l.b16 %v604
    %v642 = vunpack.c.l.b16 %v605
    %v643 = vunpack.c.l.b16 %v606
    %v644 = vunpack.c.l.b16 %v607
    %v645 = vunpack.c.l.b16 %v608
    %v646 = vunpack.c.l.b16 %v609
    %v647 = vunpack.c.l.b16 %v610
    %v648 = vunpack.c.l.b16 %v611
    %v649 = vunpack.c.l.b16 %v612
    %v650 = vunpack.c.l.b16 %v613
    %v651 = vunpack.c.l.b16 %v614
    %v652 = vunpack.c.l.b16 %v615
    %v653 = vunpack.c.l.b16 %v616
    %v654 = vunpack.c.l.b16 %v617
    %v655 = vpack.c.b16 %v640, %v639
    %v656 = vpack.c.b16 %v642, %v641
    %v657 = vpack.c.b16 %v644, %v643
    %v658 = vpack.c.b16 %v646, %v645
    %v659 = vpack.c.b16 %v648, %v647
    %v660 = vpack.c.b16 %v650, %v649
    %v661 = vpack.c.b16 %v652, %v651
    %v662 = vpack.c.b16 %v654, %v653
    %671 = vmatprep.subr.bf16.mxu0 0
    %672 = vmatpush1.bf16.msra.mxu0 %v655
    %673 = vmatprep.subr.bf16.mxu0 0
    %674 = vmatpush1.bf16.msra.mxu0 %v656
    %675 = vmatprep.subr.bf16.mxu0 0
    %676 = vmatpush1.bf16.msra.mxu0 %v657
    %677 = vmatprep.subr.bf16.mxu0 0
    %678 = vmatpush1.bf16.msra.mxu0 %v658
    %679 = vmatprep.subr.bf16.mxu0 0
    %680 = vmatpush1.bf16.msra.mxu0 %v659
    %681 = vmatprep.subr.bf16.mxu0 0
    %682 = vmatpush1.bf16.msra.mxu0 %v660
    %683 = vmatprep.subr.bf16.mxu0 0
    %684 = vmatpush1.bf16.msra.mxu0 %v661
    %685 = vmatprep.subr.bf16.mxu0 0
    %686 = vmatpush1.bf16.msra.mxu0 %v662
    %687 = vmatprep.subr.bf16.mxu0 0
    %688 = vmatpush1.bf16.msra.mxu0 0
    %689 = vmatprep.subr.bf16.mxu0 0
    %690 = vmatpush1.bf16.msra.mxu0 0
    %691 = vmatprep.subr.bf16.mxu0 0
    %692 = vmatpush1.bf16.msra.mxu0 0
    %693 = vmatprep.subr.bf16.mxu0 0
    %694 = vmatpush1.bf16.msra.mxu0 0
    %695 = vmatprep.subr.bf16.mxu0 0
    %696 = vmatpush1.bf16.msra.mxu0 0
    %697 = vmatprep.subr.bf16.mxu0 0
    %698 = vmatpush1.bf16.msra.mxu0 0
    %699 = vmatprep.subr.bf16.mxu0 0
    %700 = vmatpush1.bf16.msra.mxu0 0
    %701 = vmatprep.subr.bf16.mxu0 0
    %702 = vmatpush1.bf16.msra.mxu0 0
    %703 = vmatprep.mubr.bf16.mxu0 0
    %704 = vmatmul.mubr.bf16.gmra.mrb[0].mxu0 %v594
    %v705 = vpop.f32.mrb[0].mxu0
    %v706 = vadd.f32 %v622, %v705
    %v707 = vpop.f32.mrb[0].mxu0
    %v708 = vpop.f32.mrb[0].mxu0
    %v709 = vadd.f32 %v622, %v708
    %v710 = vpop.f32.mrb[0].mxu0
    %711 = vmatprep.mubr.bf16.mxu0 0
    %712 = vmatmul.mubr.bf16.gmra.mrb[0].mxu0 %v595
    %v713 = vpop.f32.mrb[0].mxu0
    %v714 = vadd.f32 %v622, %v713
    %v715 = vpop.f32.mrb[0].mxu0
    %v716 = vpop.f32.mrb[0].mxu0
    %v717 = vadd.f32 %v622, %v716
    %v718 = vpop.f32.mrb[0].mxu0
    %719 = vmatprep.mubr.bf16.mxu0 0
    %720 = vmatmul.mubr.bf16.gmra.mrb[0].mxu0 %v596
    %v721 = vpop.f32.mrb[0].mxu0
    %v722 = vadd.f32 %v622, %v721
    %v723 = vpop.f32.mrb[0].mxu0
    %v724 = vpop.f32.mrb[0].mxu0
    %v725 = vadd.f32 %v622, %v724
    %v726 = vpop.f32.mrb[0].mxu0
    %727 = vmatprep.mubr.bf16.mxu0 0
    %728 = vmatmul.mubr.bf16.gmra.mrb[0].mxu0 %v597
    %v729 = vpop.f32.mrb[0].mxu0
    %v730 = vadd.f32 %v622, %v729
    %v731 = vpop.f32.mrb[0].mxu0
    %v732 = vpop.f32.mrb[0].mxu0
    %v733 = vadd.f32 %v622, %v732
    %v734 = vpop.f32.mrb[0].mxu0
    %735 = vmatprep.mubr.bf16.mxu0 0
    %736 = vmatmul.mubr.bf16.gmra.mrb[0].mxu0 %v598
    %v737 = vpop.f32.mrb[0].mxu0
    %v738 = vadd.f32 %v622, %v737
    %v739 = vpop.f32.mrb[0].mxu0
    %v740 = vpop.f32.mrb[0].mxu0
    %v741 = vadd.f32 %v622, %v740
    %v742 = vpop.f32.mrb[0].mxu0
    %743 = vmatprep.mubr.bf16.mxu0 0
    %744 = vmatmul.mubr.bf16.gmra.mrb[0].mxu0 %v599
    %v745 = vpop.f32.mrb[0].mxu0
    %v746 = vadd.f32 %v622, %v745
    %v747 = vpop.f32.mrb[0].mxu0
    %v748 = vpop.f32.mrb[0].mxu0
    %v749 = vadd.f32 %v622, %v748
    %v750 = vpop.f32.mrb[0].mxu0
    %751 = vmatprep.mubr.bf16.mxu0 0
    %752 = vmatmul.mubr.bf16.gmra.mrb[0].mxu0 %v600
    %v753 = vpop.f32.mrb[0].mxu0
    %v754 = vadd.f32 %v622, %v753
    %v755 = vpop.f32.mrb[0].mxu0
    %v756 = vpop.f32.mrb[0].mxu0
    %v757 = vadd.f32 %v622, %v756
    %v758 = vpop.f32.mrb[0].mxu0
    %759 = vmatprep.mubr.bf16.mxu0 0
    %760 = vmatmul.mubr.bf16.gmra.mrb[0].mxu0 %v601
    %v761 = vpop.f32.mrb[0].mxu0
    %v762 = vadd.f32 %v622, %v761
    %v763 = vpop.f32.mrb[0].mxu0
    %v764 = vpop.f32.mrb[0].mxu0
    %v765 = vadd.f32 %v622, %v764
    %v766 = vpop.f32.mrb[0].mxu0
    %767 = vdwg.mxu0
    %v768 = vmax.f32 %v706, 0.0
    %v769 = vmax.f32 %v709, 0.0
    %v770 = vmax.f32 %v714, 0.0
    %v771 = vmax.f32 %v717, 0.0
    %v772 = vmax.f32 %v722, 0.0
    %v773 = vmax.f32 %v725, 0.0
    %v774 = vmax.f32 %v730, 0.0
    %v775 = vmax.f32 %v733, 0.0
    %v776 = vmax.f32 %v738, 0.0
    %v777 = vmax.f32 %v741, 0.0
    %v778 = vmax.f32 %v746, 0.0
    %v779 = vmax.f32 %v749, 0.0
    %v780 = vmax.f32 %v754, 0.0
    %v781 = vmax.f32 %v757, 0.0
    %v782 = vmax.f32 %v762, 0.0
    %v783 = vmax.f32 %v765, 0.0
    %v784 = vpack.c.bf16 %v769, %v768
    %v785 = vpack.c.bf16 %v771, %v770
    %v786 = vpack.c.bf16 %v773, %v772
    %v787 = vpack.c.bf16 %v775, %v774
    %v788 = vpack.c.bf16 %v777, %v776
    %v789 = vpack.c.bf16 %v779, %v778
    %v790 = vpack.c.bf16 %v781, %v780
    %v791 = vpack.c.bf16 %v783, %v782
    %v792 = vld [vmem:[#allocation7 + $0x80] sm:$0xf]
    %v793 = vld [vmem:[#allocation7 + $0x84] sm:$0xf]
    %v794 = vld [vmem:[#allocation7 + $0x88] sm:$0xf]
    %v795 = vld [vmem:[#allocation7 + $0x8c] sm:$0xf]
    %v796 = vld [vmem:[#allocation7 + $0x90] sm:$0xf]
    %v797 = vld [vmem:[#allocation7 + $0x94] sm:$0xf]
    %v798 = vld [vmem:[#allocation7 + $0x98] sm:$0xf]
    %v799 = vld [vmem:[#allocation7 + $0x9c] sm:$0xf]
    %v800 = vld [vmem:[#allocation7 + $0xa0] sm:$0xf]
    %v801 = vld [vmem:[#allocation7 + $0xa4] sm:$0xf]
    %v802 = vld [vmem:[#allocation7 + $0xa8] sm:$0xf]
    %v803 = vld [vmem:[#allocation7 + $0xac] sm:$0xf]
    %v804 = vld [vmem:[#allocation7 + $0xb0] sm:$0xf]
    %v805 = vld [vmem:[#allocation7 + $0xb4] sm:$0xf]
    %v806 = vld [vmem:[#allocation7 + $0xb8] sm:$0xf]
    %v807 = vld [vmem:[#allocation7 + $0xbc] sm:$0xf]
    %v808 = vld [vmem:[#allocation8 + $0x10] sm:$0x1]
    %v809 = vlaneseq
    %v810 = vshrl.u32 %v809, 7
    %v811 = vsub.s32 0, %v810
    %v812 = vrot.slane %v808, %v811
    %v829 = vunpack.c.l.b16 %v792
    %v830 = vunpack.c.l.b16 %v793
    %v831 = vunpack.c.l.b16 %v794
    %v832 = vunpack.c.l.b16 %v795
    %v833 = vunpack.c.l.b16 %v796
    %v834 = vunpack.c.l.b16 %v797
    %v835 = vunpack.c.l.b16 %v798
    %v836 = vunpack.c.l.b16 %v799
    %v837 = vunpack.c.l.b16 %v800
    %v838 = vunpack.c.l.b16 %v801
    %v839 = vunpack.c.l.b16 %v802
    %v840 = vunpack.c.l.b16 %v803
    %v841 = vunpack.c.l.b16 %v804
    %v842 = vunpack.c.l.b16 %v805
    %v843 = vunpack.c.l.b16 %v806
    %v844 = vunpack.c.l.b16 %v807
    %v845 = vpack.c.b16 %v830, %v829
    %v846 = vpack.c.b16 %v832, %v831
    %v847 = vpack.c.b16 %v834, %v833
    %v848 = vpack.c.b16 %v836, %v835
    %v849 = vpack.c.b16 %v838, %v837
    %v850 = vpack.c.b16 %v840, %v839
    %v851 = vpack.c.b16 %v842, %v841
    %v852 = vpack.c.b16 %v844, %v843
    %861 = vmatprep.subr.bf16.mxu0 0
    %862 = vmatpush1.bf16.msra.mxu0 %v845
    %863 = vmatprep.subr.bf16.mxu0 0
    %864 = vmatpush1.bf16.msra.mxu0 %v846
    %865 = vmatprep.subr.bf16.mxu0 0
    %866 = vmatpush1.bf16.msra.mxu0 %v847
    %867 = vmatprep.subr.bf16.mxu0 0
    %868 = vmatpush1.bf16.msra.mxu0 %v848
    %869 = vmatprep.subr.bf16.mxu0 0
    %870 = vmatpush1.bf16.msra.mxu0 %v849
    %871 = vmatprep.subr.bf16.mxu0 0
    %872 = vmatpush1.bf16.msra.mxu0 %v850
    %873 = vmatprep.subr.bf16.mxu0 0
    %874 = vmatpush1.bf16.msra.mxu0 %v851
    %875 = vmatprep.subr.bf16.mxu0 0
    %876 = vmatpush1.bf16.msra.mxu0 %v852
    %877 = vmatprep.subr.bf16.mxu0 0
    %878 = vmatpush1.bf16.msra.mxu0 0
    %879 = vmatprep.subr.bf16.mxu0 0
    %880 = vmatpush1.bf16.msra.mxu0 0
    %881 = vmatprep.subr.bf16.mxu0 0
    %882 = vmatpush1.bf16.msra.mxu0 0
    %883 = vmatprep.subr.bf16.mxu0 0
    %884 = vmatpush1.bf16.msra.mxu0 0
    %885 = vmatprep.subr.bf16.mxu0 0
    %886 = vmatpush1.bf16.msra.mxu0 0
    %887 = vmatprep.subr.bf16.mxu0 0
    %888 = vmatpush1.bf16.msra.mxu0 0
    %889 = vmatprep.subr.bf16.mxu0 0
    %890 = vmatpush1.bf16.msra.mxu0 0
    %891 = vmatprep.subr.bf16.mxu0 0
    %892 = vmatpush1.bf16.msra.mxu0 0
    %893 = vmatprep.mubr.bf16.mxu0 0
    %894 = vmatmul.mubr.bf16.gmra.mrb[0].mxu0 %v784
    %v895 = vpop.f32.mrb[0].mxu0
    %v896 = vadd.f32 %v812, %v895
    %v897 = vpop.f32.mrb[0].mxu0
    %v898 = vpop.f32.mrb[0].mxu0
    %v899 = vadd.f32 %v812, %v898
    %v900 = vpop.f32.mrb[0].mxu0
    %901 = vmatprep.mubr.bf16.mxu0 0
    %902 = vmatmul.mubr.bf16.gmra.mrb[0].mxu0 %v785
    %v903 = vpop.f32.mrb[0].mxu0
    %v904 = vadd.f32 %v812, %v903
    %v905 = vpop.f32.mrb[0].mxu0
    %v906 = vpop.f32.mrb[0].mxu0
    %v907 = vadd.f32 %v812, %v906
    %v908 = vpop.f32.mrb[0].mxu0
    %909 = vmatprep.mubr.bf16.mxu0 0
    %910 = vmatmul.mubr.bf16.gmra.mrb[0].mxu0 %v786
    %v911 = vpop.f32.mrb[0].mxu0
    %v912 = vadd.f32 %v812, %v911
    %v913 = vpop.f32.mrb[0].mxu0
    %v914 = vpop.f32.mrb[0].mxu0
    %v915 = vadd.f32 %v812, %v914
    %v916 = vpop.f32.mrb[0].mxu0
    %917 = vmatprep.mubr.bf16.mxu0 0
    %918 = vmatmul.mubr.bf16.gmra.mrb[0].mxu0 %v787
    %v919 = vpop.f32.mrb[0].mxu0
    %v920 = vadd.f32 %v812, %v919
    %v921 = vpop.f32.mrb[0].mxu0
    %v922 = vpop.f32.mrb[0].mxu0
    %v923 = vadd.f32 %v812, %v922
    %v924 = vpop.f32.mrb[0].mxu0
    %925 = vmatprep.mubr.bf16.mxu0 0
    %926 = vmatmul.mubr.bf16.gmra.mrb[0].mxu0 %v788
    %v927 = vpop.f32.mrb[0].mxu0
    %v928 = vadd.f32 %v812, %v927
    %v929 = vpop.f32.mrb[0].mxu0
    %v930 = vpop.f32.mrb[0].mxu0
    %v931 = vadd.f32 %v812, %v930
    %v932 = vpop.f32.mrb[0].mxu0
    %933 = vmatprep.mubr.bf16.mxu0 0
    %934 = vmatmul.mubr.bf16.gmra.mrb[0].mxu0 %v789
    %v935 = vpop.f32.mrb[0].mxu0
    %v936 = vadd.f32 %v812, %v935
    %v937 = vpop.f32.mrb[0].mxu0
    %v938 = vpop.f32.mrb[0].mxu0
    %v939 = vadd.f32 %v812, %v938
    %v940 = vpop.f32.mrb[0].mxu0
    %941 = vmatprep.mubr.bf16.mxu0 0
    %942 = vmatmul.mubr.bf16.gmra.mrb[0].mxu0 %v790
    %v943 = vpop.f32.mrb[0].mxu0
    %v944 = vadd.f32 %v812, %v943
    %v945 = vpop.f32.mrb[0].mxu0
    %v946 = vpop.f32.mrb[0].mxu0
    %v947 = vadd.f32 %v812, %v946
    %v948 = vpop.f32.mrb[0].mxu0
    %949 = vmatprep.mubr.bf16.mxu0 0
    %950 = vmatmul.mubr.bf16.gmra.mrb[0].mxu0 %v791
    %v951 = vpop.f32.mrb[0].mxu0
    %v952 = vadd.f32 %v812, %v951
    %v953 = vpop.f32.mrb[0].mxu0
    %v954 = vpop.f32.mrb[0].mxu0
    %v955 = vadd.f32 %v812, %v954
    %v956 = vpop.f32.mrb[0].mxu0
    %957 = vdwg.mxu0
    %958 = vst [vmem:[#allocation10] sm:$0xff] %v896
    %959 = vst [vmem:[#allocation10 + $0x8] sm:$0xff] %v899
    %960 = vst [vmem:[#allocation10 + $0x10] sm:$0xff] %v904
    %961 = vst [vmem:[#allocation10 + $0x18] sm:$0xff] %v907
    %962 = vst [vmem:[#allocation10 + $0x20] sm:$0xff] %v912
    %963 = vst [vmem:[#allocation10 + $0x28] sm:$0xff] %v915
    %964 = vst [vmem:[#allocation10 + $0x30] sm:$0xff] %v920
    %965 = vst [vmem:[#allocation10 + $0x38] sm:$0xff] %v923
    %966 = vst [vmem:[#allocation10 + $0x40] sm:$0xff] %v928
    %967 = vst [vmem:[#allocation10 + $0x48] sm:$0xff] %v931
    %968 = vst [vmem:[#allocation10 + $0x50] sm:$0xff] %v936
    %969 = vst [vmem:[#allocation10 + $0x58] sm:$0xff] %v939
    %970 = vst [vmem:[#allocation10 + $0x60] sm:$0xff] %v944
    %971 = vst [vmem:[#allocation10 + $0x68] sm:$0xff] %v947
    %972 = vst [vmem:[#allocation10 + $0x70] sm:$0xff] %v952
    %973 = vst [vmem:[#allocation10 + $0x78] sm:$0xff] %v955
    // Predicated region
    $region34: #{tpu_custom_call.1} parent=1 // pred_check
      _
    $region35: #{tpu_custom_call.1} parent=1 // pred_check_branch
      %975 = sbr.rel (0) target = $region37
    $region36: #{tpu_custom_call.1} parent=1 // pred_region
      %s977 = ssub.s32 2048, 2048
      %978 = vsyncadd [#allocation4], %s977
      %s979 = sshll.u32 [#allocation10], 4
      %s980 = int_to_ptr.vmem [resolvable:$true] %s979
      %985 = dma.vmem_to_hbm [thread:$0]  %s980, 2048, %s4, [#allocation4], 128, 128, 8
    $region37: #{tpu_custom_call.1} parent=1 // pred_fallthru
      _
    // Predicated region
    $region38: #{tpu_custom_call.1} parent=1 // pred_check
      _
    $region39: #{tpu_custom_call.1} parent=1 // pred_check_branch
      %987 = sbr.rel (0) target = $region41
    $region40: #{tpu_custom_call.1} parent=1 // pred_region
      %988 = dma.done [#allocation4], 2048
    $region41: #{tpu_custom_call.1} parent=1 // pred_fallthru
      _
    %989 = vsyncpa [#allocation3], 1
    %990 = vsyncpa [#allocation6], 1
    %991 = vsyncpa [#allocation9], 1
    %992 = vsyncpa [#allocation4], 1

</llo_original>
